<compile_context>
chip_gen: v5e
topology: v5e:2x2
jax: 0.10.0
libtpu: 0.0.40
codegen_flags: <defaults>
</compile_context>

<pallas_src>
import functools
import math

import jax
import jax.numpy as jnp
import numpy as np
from jax.experimental import pallas as pl
from jax.experimental.pallas import tpu as pltpu


# --------------------------------------------------------------------------- utilities

def _fit(n, pref):
    """Tile size for a weight axis of length n: `pref` if it divides n, else the largest
    128-multiple divisor <= pref, else the full axis (model dims are normally aligned)."""
    if n >= pref and n % pref == 0:
        return pref
    for t in (512, 384, 256, 128):
        if t <= pref and n >= t and n % t == 0:
            return t
    return n


def _row_tiles(m, pref):
    """Tile size + padded length for the row (M = B*T) axis.  Rows are padded so tiling
    always engages even when M has no 128-multiple divisor."""
    if m <= pref:
        return m, m
    if m % pref == 0:
        return pref, m
    for t in (512, 384, 256, 128):
        if t <= pref and m % t == 0:
            return t, m
    t = max(128, (min(pref, 512) // 128) * 128)
    return t, ((m + t - 1) // t) * t


def _pad_rows(x2d, m_pad):
    m = x2d.shape[0]
    if m_pad == m:
        return x2d
    return jnp.pad(x2d, ((0, m_pad - m), (0, 0)))


def _blk_bytes(*blocks):
    total = 0
    for shape, dtype in blocks:
        total += int(np.prod(shape)) * jnp.dtype(dtype).itemsize
    return total


def _mosaic(semantics, block_bytes):
    # 3x covers double-buffering + slack; capped at 64 MiB (safe on v7x, raises the
    # 16/32 MiB default scoped limits on v5e/v6e when big tiles are in play).
    limit = int(min(max(3 * block_bytes, 32 * 1024 * 1024), 64 * 1024 * 1024))
    return pltpu.CompilerParams(dimension_semantics=semantics, vmem_limit_bytes=limit)


class _KeyGen:
    def __init__(self, key):
        self._key = key

    def __call__(self):
        self._key, sub = jax.random.split(self._key)
        return sub


# ------------------------------------------------------------------- tiled plain linear

def _matmul_kernel(x_ref, w_ref, b_ref, o_ref, acc_ref, *, activation, n_k):
    @pl.when(pl.program_id(2) == 0)
    def _():
        acc_ref[...] = jnp.zeros_like(acc_ref)

    acc_ref[...] += jnp.dot(x_ref[...], w_ref[...], preferred_element_type=jnp.float32)

    @pl.when(pl.program_id(2) == n_k - 1)
    def _():
        y = acc_ref[...] + b_ref[...]
        if activation == "gelu":
            y = jax.nn.gelu(y)
        o_ref[...] = y.astype(o_ref.dtype)


def _matmul_res_kernel(x_ref, w_ref, b_ref, res_ref, o_ref, acc_ref, *, activation, n_k):
    @pl.when(pl.program_id(2) == 0)
    def _():
        acc_ref[...] = jnp.zeros_like(acc_ref)

    acc_ref[...] += jnp.dot(x_ref[...], w_ref[...], preferred_element_type=jnp.float32)

    @pl.when(pl.program_id(2) == n_k - 1)
    def _():
        y = acc_ref[...] + b_ref[...]
        if activation == "gelu":
            y = jax.nn.gelu(y)
        y = y + res_ref[...].astype(jnp.float32)
        o_ref[...] = y.astype(o_ref.dtype)


def linear(x2d, w, b, *, residual=None, activation="none", tm=512, tn=512, tk=512,
           out_dtype=jnp.bfloat16):
    """y = act(x @ w + b) (+ residual).  x2d: (M, K) bf16, w: (K, N) bf16, b: (N,) f32."""
    M, K = x2d.shape
    K2, N = w.shape
    assert K == K2
    tm, M_pad = _row_tiles(M, tm)
    tn, tk = _fit(N, tn), _fit(K, tk)
    grid = (M_pad // tm, N // tn, K // tk)
    b2 = b.reshape(1, N).astype(jnp.float32)
    xp = _pad_rows(x2d.astype(jnp.bfloat16), M_pad)

    in_specs = [
        pl.BlockSpec((tm, tk), lambda i, j, k: (i, k)),
        pl.BlockSpec((tk, tn), lambda i, j, k: (k, j)),
        pl.BlockSpec((1, tn), lambda i, j, k: (0, j)),
    ]
    args = [xp, w, b2]
    est = _blk_bytes(((tm, tk), jnp.bfloat16), ((tk, tn), jnp.bfloat16),
                     ((tm, tn), out_dtype), ((tm, tn), jnp.float32))
    if residual is not None:
        rp = _pad_rows(residual.astype(jnp.bfloat16), M_pad)
        in_specs.append(pl.BlockSpec((tm, tn), lambda i, j, k: (i, j)))
        args.append(rp)
        est += _blk_bytes(((tm, tn), jnp.bfloat16))
        kernel = functools.partial(_matmul_res_kernel, activation=activation, n_k=grid[2])
    else:
        kernel = functools.partial(_matmul_kernel, activation=activation, n_k=grid[2])

    # TODO(synk): sweep pipeline_mode=pl.Buffered(3) on the weight BlockSpec when the
    # K-dim weight DMA is the exposed latency.
    out = pl.pallas_call(
        kernel,
        out_shape=jax.ShapeDtypeStruct((M_pad, N), out_dtype),
        grid=grid,
        in_specs=in_specs,
        out_specs=pl.BlockSpec((tm, tn), lambda i, j, k: (i, j)),
        scratch_shapes=[pltpu.VMEM((tm, tn), jnp.float32)],
        compiler_params=_mosaic(("parallel", "parallel", "arbitrary"), est),
    )(*args)
    return out[:M] if M_pad != M else out


# ------------------------------------------------------------- fused LayerNorm + linear

def _ln_linear_kernel(x_ref, g_ref, b_ref, w_ref, bias_ref, o_ref, xn_ref, *, eps, activation):
    # LayerNorm of the row tile is computed once (j == 0) and reused for all N tiles.
    @pl.when(pl.program_id(1) == 0)
    def _():
        x = x_ref[...].astype(jnp.float32)
        mu = jnp.mean(x, axis=-1, keepdims=True)
        var = jnp.mean((x - mu) ** 2, axis=-1, keepdims=True)
        xn = (x - mu) * jax.lax.rsqrt(var + eps)
        xn_ref[...] = (xn * g_ref[...] + b_ref[...]).astype(xn_ref.dtype)

    y = jnp.dot(xn_ref[...], w_ref[...], preferred_element_type=jnp.float32) + bias_ref[...]
    if activation == "gelu":
        y = jax.nn.gelu(y)
    o_ref[...] = y.astype(o_ref.dtype)


def ln_linear(x2d, gamma, beta, w, b, *, activation="none", eps=1e-5, tm=256, tn=512):
    """y = act(LayerNorm(x) @ w + b), LN fused and computed once per row tile."""
    M, D = x2d.shape
    _, N = w.shape
    tm, M_pad = _row_tiles(M, tm)
    tn = _fit(N, tn)
    xp = _pad_rows(x2d.astype(jnp.bfloat16), M_pad)
    grid = (M_pad // tm, N // tn)
    est = _blk_bytes(((tm, D), jnp.bfloat16), ((D, tn), jnp.bfloat16),
                     ((tm, tn), jnp.bfloat16), ((tm, D), jnp.bfloat16))
    out = pl.pallas_call(
        functools.partial(_ln_linear_kernel, eps=eps, activation=activation),
        out_shape=jax.ShapeDtypeStruct((M_pad, N), jnp.bfloat16),
        grid=grid,
        in_specs=[
            pl.BlockSpec((tm, D), lambda i, j: (i, 0)),
            pl.BlockSpec((1, D), lambda i, j: (0, 0)),
            pl.BlockSpec((1, D), lambda i, j: (0, 0)),
            pl.BlockSpec((D, tn), lambda i, j: (0, j)),
            pl.BlockSpec((1, tn), lambda i, j: (0, j)),
        ],
        out_specs=pl.BlockSpec((tm, tn), lambda i, j: (i, j)),
        scratch_shapes=[pltpu.VMEM((tm, D), jnp.bfloat16)],
        # j axis must stay sequential per core (scratch reuse across j).
        compiler_params=_mosaic(("parallel", "arbitrary"), est),
    )(xp, gamma.reshape(1, D).astype(jnp.float32),
      beta.reshape(1, D).astype(jnp.float32), w, b.reshape(1, N).astype(jnp.float32))
    return out[:M] if M_pad != M else out


# ---------------------------------------------- fused LayerNorm + dual (Q, K|V) projection

def _ln_qkv_kernel(x_ref, g_ref, b_ref, wq_ref, bq_ref, wkv_ref, bkv_ref,
                   q_ref, kv_ref, *, eps):
    x = x_ref[...].astype(jnp.float32)
    mu = jnp.mean(x, axis=-1, keepdims=True)
    var = jnp.mean((x - mu) ** 2, axis=-1, keepdims=True)
    xn = ((x - mu) * jax.lax.rsqrt(var + eps) * g_ref[...] + b_ref[...]).astype(jnp.bfloat16)
    q_ref[...] = (jnp.dot(xn, wq_ref[...], preferred_element_type=jnp.float32)
                  + bq_ref[...]).astype(q_ref.dtype)
    kv_ref[...] = (jnp.dot(xn, wkv_ref[...], preferred_element_type=jnp.float32)
                   + bkv_ref[...]).astype(kv_ref.dtype)


def ln_qkv(x2d, gamma, beta, p, *, eps=1e-5, tm=256):
    """(q, kv) = LayerNorm(x) @ (wq, wkv) + (bq, bkv) — LN computed once, two outputs."""
    M, D = x2d.shape
    tm, M_pad = _row_tiles(M, tm)
    xp = _pad_rows(x2d.astype(jnp.bfloat16), M_pad)
    est = _blk_bytes(((tm, D), jnp.bfloat16), ((D, D), jnp.bfloat16), ((D, 2 * D), jnp.bfloat16),
                     ((tm, D), jnp.bfloat16), ((tm, 2 * D), jnp.bfloat16))
    # TODO(synk): for very large d_model, tile the output dim instead of keeping both
    # projection weights fully resident in VMEM.
    q, kv = pl.pallas_call(
        functools.partial(_ln_qkv_kernel, eps=eps),
        out_shape=(jax.ShapeDtypeStruct((M_pad, D), jnp.bfloat16),
                   jax.ShapeDtypeStruct((M_pad, 2 * D), jnp.bfloat16)),
        grid=(M_pad // tm,),
        in_specs=[
            pl.BlockSpec((tm, D), lambda i: (i, 0)),
            pl.BlockSpec((1, D), lambda i: (0, 0)),
            pl.BlockSpec((1, D), lambda i: (0, 0)),
            pl.BlockSpec((D, D), lambda i: (0, 0)),
            pl.BlockSpec((1, D), lambda i: (0, 0)),
            pl.BlockSpec((D, 2 * D), lambda i: (0, 0)),
            pl.BlockSpec((1, 2 * D), lambda i: (0, 0)),
        ],
        out_specs=[pl.BlockSpec((tm, D), lambda i: (i, 0)),
                   pl.BlockSpec((tm, 2 * D), lambda i: (i, 0))],
        compiler_params=_mosaic(("parallel",), est),
    )(xp, gamma.reshape(1, D).astype(jnp.float32), beta.reshape(1, D).astype(jnp.float32),
      p["wq"], p["bq"].reshape(1, D).astype(jnp.float32),
      p["wkv"], p["bkv"].reshape(1, 2 * D).astype(jnp.float32))
    if M_pad != M:
        q, kv = q[:M], kv[:M]
    return q, kv


# ------------------------------------------------- fused LayerNorm + MLP + residual add

def _ln_mlp_kernel(x_ref, g_ref, b_ref, w1_ref, b1_ref, w2_ref, b2_ref, o_ref, *, eps):
    x = x_ref[...].astype(jnp.float32)
    mu = jnp.mean(x, axis=-1, keepdims=True)
    var = jnp.mean((x - mu) ** 2, axis=-1, keepdims=True)
    xn = ((x - mu) * jax.lax.rsqrt(var + eps) * g_ref[...] + b_ref[...]).astype(jnp.bfloat16)
    h = jnp.dot(xn, w1_ref[...], preferred_element_type=jnp.float32) + b1_ref[...]
    h = jax.nn.gelu(h)
    y = jnp.dot(h.astype(jnp.bfloat16), w2_ref[...], preferred_element_type=jnp.float32) + b2_ref[...]
    o_ref[...] = (x + y).astype(o_ref.dtype)   # residual fused into the epilogue


def ln_mlp(x2d, gamma, beta, p, *, eps=1e-5, tm=256):
    """out = x + GELU(LayerNorm(x) @ w1 + b1) @ w2 + b2."""
    M, D = x2d.shape
    F = p["w1"].shape[1]
    weight_bytes = 2 * (D * F + F * D)
    if weight_bytes > 24 * 1024 * 1024:
        # Too big to keep both MLP weights resident (v7x 64 MiB VMEM): split into two
        # tiled kernels. TODO(synk): replace with an in-kernel F-tiled pipeline.
        h = ln_linear(x2d, gamma, beta, p["w1"], p["b1"], activation="gelu", eps=eps)
        return linear(h, p["w2"], p["b2"], residual=x2d)

    tm, M_pad = _row_tiles(M, tm)
    xp = _pad_rows(x2d.astype(jnp.bfloat16), M_pad)
    est = _blk_bytes(((tm, D), jnp.bfloat16), ((D, F), jnp.bfloat16), ((F, D), jnp.bfloat16),
                     ((tm, F), jnp.float32), ((tm, D), jnp.bfloat16))
    out = pl.pallas_call(
        functools.partial(_ln_mlp_kernel, eps=eps),
        out_shape=jax.ShapeDtypeStruct((M_pad, D), jnp.bfloat16),
        grid=(M_pad // tm,),
        in_specs=[
            pl.BlockSpec((tm, D), lambda i: (i, 0)),
            pl.BlockSpec((1, D), lambda i: (0, 0)),
            pl.BlockSpec((1, D), lambda i: (0, 0)),
            pl.BlockSpec((D, F), lambda i: (0, 0)),
            pl.BlockSpec((1, F), lambda i: (0, 0)),
            pl.BlockSpec((F, D), lambda i: (0, 0)),
            pl.BlockSpec((1, D), lambda i: (0, 0)),
        ],
        out_specs=pl.BlockSpec((tm, D), lambda i: (i, 0)),
        compiler_params=_mosaic(("parallel",), est),
    )(xp, gamma.reshape(1, D).astype(jnp.float32), beta.reshape(1, D).astype(jnp.float32),
      p["w1"], p["b1"].reshape(1, F).astype(jnp.float32),
      p["w2"], p["b2"].reshape(1, D).astype(jnp.float32))
    return out[:M] if M_pad != M else out


# ---------------------------------------------------------------------------- attention
# Grid = (batch, q-tiles); all heads of one (batch, q-tile) processed per step so the
# activation last dim stays D (lane-dense). Scale folded into Q, 1/denominator folded
# into the per-head PV output, per-head results stored directly (no concat).

def _attn_kernel(q_ref, kv_ref, o_ref, *, n_heads, causal, scale):
    D = o_ref.shape[-1]
    Tq = q_ref.shape[1]
    Tk = kv_ref.shape[1]
    Dh = D // n_heads

    q = (q_ref[0].astype(jnp.float32) * scale).astype(jnp.bfloat16)   # scale folded once
    kv = kv_ref[0]
    k, v = kv[:, :D], kv[:, D:]

    if causal:
        q_off = pl.program_id(1) * Tq
        row = jax.lax.broadcasted_iota(jnp.int32, (Tq, Tk), 0) + q_off
        col = jax.lax.broadcasted_iota(jnp.int32, (Tq, Tk), 1)
        neg = jnp.where(col <= row, 0.0, -1e30).astype(jnp.float32)    # shared by all heads

    for h in range(n_heads):
        sl = slice(h * Dh, (h + 1) * Dh)
        s = jnp.dot(q[:, sl], k[:, sl].T, preferred_element_type=jnp.float32)
        if causal:
            s = s + neg
        m = jnp.max(s, axis=-1, keepdims=True)
        p = jnp.exp(s - m)
        l = jnp.sum(p, axis=-1, keepdims=True)
        o = jnp.dot(p.astype(jnp.bfloat16), v[:, sl], preferred_element_type=jnp.float32)
        o = o * pl.reciprocal(l, approx=True)
        # store each head before computing the next: bounds live ranges, no concat buffer
        o_ref[0, :, sl] = o.astype(o_ref.dtype)


def attention(q3d, kv3d, n_heads, causal):
    """q3d: (B, Tq, D), kv3d: (B, Tk, 2D) packed [K|V] -> (B, Tq, D) bf16."""
    B, Tq, D = q3d.shape
    Tk = kv3d.shape[1]
    scale = 1.0 / math.sqrt(D // n_heads)
    tq = Tq
    if Tq >= 256:
        for t in (512, 256, 128):
            if Tq % t == 0:
                tq = t
                break
    grid = (B, Tq // tq)
    est = _blk_bytes(((1, tq, D), jnp.bfloat16), ((1, Tk, 2 * D), jnp.bfloat16),
                     ((1, tq, D), jnp.bfloat16), ((tq, Tk), jnp.float32),
                     ((tq, Tk), jnp.float32))
    # TODO(synk): for long Tk, convert to a flash-style inner loop streaming (tk, 2D)
    # K|V tiles with an online softmax.
    return pl.pallas_call(
        functools.partial(_attn_kernel, n_heads=n_heads, causal=causal, scale=scale),
        out_shape=jax.ShapeDtypeStruct((B, Tq, D), jnp.bfloat16),
        grid=grid,
        in_specs=[
            pl.BlockSpec((1, tq, D), lambda b, qi: (b, qi, 0)),
            pl.BlockSpec((1, Tk, 2 * D), lambda b, qi: (b, 0, 0)),
        ],
        out_specs=pl.BlockSpec((1, tq, D), lambda b, qi: (b, qi, 0)),
        compiler_params=_mosaic(("parallel", "parallel"), est),
    )(q3d.astype(jnp.bfloat16), kv3d.astype(jnp.bfloat16))


# ------------------------------------------------------------------------- model pieces

def encoder_block(x, p, n_heads):
    B, T, D = x.shape
    x2 = x.reshape(B * T, D)
    q2, kv2 = ln_qkv(x2, p["ln1_g"], p["ln1_b"], p["attn"])
    a = attention(q2.reshape(B, T, D), kv2.reshape(B, T, 2 * D), n_heads, causal=False)
    x2 = linear(a.reshape(B * T, D), p["attn"]["wo"], p["attn"]["bo"], residual=x2)
    x2 = ln_mlp(x2, p["ln2_g"], p["ln2_b"], p["mlp"])
    return x2.reshape(B, T, D)


def decoder_block(y, enc_out, p, n_heads):
    B, T, D = y.shape
    Tk = enc_out.shape[1]
    y2 = y.reshape(B * T, D)
    # causal self-attention
    q2, kv2 = ln_qkv(y2, p["ln1_g"], p["ln1_b"], p["self_attn"])
    a = attention(q2.reshape(B, T, D), kv2.reshape(B, T, 2 * D), n_heads, causal=True)
    y2 = linear(a.reshape(B * T, D), p["self_attn"]["wo"], p["self_attn"]["bo"], residual=y2)
    # cross-attention: q from LN(y), packed K|V projected from encoder output
    q = ln_linear(y2, p["ln2_g"], p["ln2_b"], p["cross_attn"]["wq"], p["cross_attn"]["bq"])
    kv = linear(enc_out.reshape(B * Tk, D), p["cross_attn"]["wkv"], p["cross_attn"]["bkv"])
    a = attention(q.reshape(B, T, D), kv.reshape(B, Tk, 2 * D), n_heads, causal=False)
    y2 = linear(a.reshape(B * T, D), p["cross_attn"]["wo"], p["cross_attn"]["bo"], residual=y2)
    # MLP
    y2 = ln_mlp(y2, p["ln3_g"], p["ln3_b"], p["mlp"])
    return y2.reshape(B, T, D)


def sinusoidal_pe(max_len, d_model):
    pos = np.arange(max_len, dtype=np.float32)[:, None]
    div = np.exp(np.arange(0, d_model, 2, dtype=np.float32) * (-math.log(10000.0) / d_model))
    pe = np.zeros((max_len, d_model), dtype=np.float32)
    pe[:, 0::2] = np.sin(pos * div)
    pe[:, 1::2] = np.cos(pos * div)
    return jnp.asarray(pe)


def seq2seq_transformer_forward(params, x_tok, y_tok, n_heads, targets=None):
    """Mirrors Seq2SeqTransformer.forward with token input/output specs."""
    B, Tin = x_tok.shape
    _, Tout = y_tok.shape
    x = jnp.take(params["src_emb"], x_tok, axis=0)          # source_embedder
    y = jnp.take(params["tgt_emb"], y_tok, axis=0)          # target_embedder
    x = (x + params["pe_in"][None, :Tin, :]).astype(jnp.bfloat16)   # source_pos_embedder (p=0)
    y = (y + params["pe_out"][None, :Tout, :]).astype(jnp.bfloat16)  # target_pos_embedder (p=0)
    for blk in params["enc_blocks"]:
        x = encoder_block(x, blk, n_heads)
    for blk in params["dec_blocks"]:
        y = decoder_block(y, x, blk, n_heads)
    D = y.shape[-1]
    if targets is None:
        y_last = y[:, -1, :]                                 # final_out(y[:, [-1], :])
        logits = linear(y_last, params["wout"], params["bout"],
                        out_dtype=jnp.float32).reshape(B, 1, -1)
        loss = None
    else:
        logits2d = linear(y.reshape(B * Tout, D), params["wout"], params["bout"],
                          out_dtype=jnp.float32)
        logits = logits2d.reshape(B, Tout, -1)
        tgt = targets.reshape(-1)
        logp = jax.nn.log_softmax(logits2d, axis=-1)
        valid = tgt != -1
        nll = -jnp.take_along_axis(logp, jnp.where(valid, tgt, 0)[:, None], axis=1)[:, 0]
        loss = jnp.sum(jnp.where(valid, nll, 0.0)) / jnp.maximum(jnp.sum(valid), 1)
    return logits, loss


# ---------------------------------------------------------------------------- param init

def init_params(key, *, vocab_in, vocab_out, d_model, out_dim, n_enc, n_dec, d_ff,
                in_block_size, out_block_size):
    kg = _KeyGen(key)

    def dense(din, dout):
        w = jax.random.normal(kg(), (din, dout), jnp.float32) / math.sqrt(din)
        return w.astype(jnp.bfloat16), jnp.zeros((dout,), jnp.float32)

    def self_attn_params(d):
        wq, bq = dense(d, d)
        wkv, bkv = dense(d, 2 * d)
        wo, bo = dense(d, d)
        return dict(wq=wq, bq=bq, wkv=wkv, bkv=bkv, wo=wo, bo=bo)

    def cross_attn_params(d):
        wq, bq = dense(d, d)
        wkv, bkv = dense(d, 2 * d)
        wo, bo = dense(d, d)
        return dict(wq=wq, bq=bq, wkv=wkv, bkv=bkv, wo=wo, bo=bo)

    def mlp_params(d, dff):
        w1, b1 = dense(d, dff)
        w2, b2 = dense(dff, d)
        return dict(w1=w1, b1=b1, w2=w2, b2=b2)

    params = dict(
        src_emb=jax.random.normal(kg(), (vocab_in, d_model), jnp.float32) * 0.02,
        tgt_emb=jax.random.normal(kg(), (vocab_out, d_model), jnp.float32) * 0.02,
        pe_in=sinusoidal_pe(in_block_size, d_model),
        pe_out=sinusoidal_pe(out_block_size, d_model),
        enc_blocks=[],
        dec_blocks=[],
    )
    for _ in range(n_enc):
        params["enc_blocks"].append(dict(
            ln1_g=jnp.ones((d_model,)), ln1_b=jnp.zeros((d_model,)),
            ln2_g=jnp.ones((d_model,)), ln2_b=jnp.zeros((d_model,)),
            attn=self_attn_params(d_model), mlp=mlp_params(d_model, d_ff)))
    for _ in range(n_dec):
        params["dec_blocks"].append(dict(
            ln1_g=jnp.ones((d_model,)), ln1_b=jnp.zeros((d_model,)),
            ln2_g=jnp.ones((d_model,)), ln2_b=jnp.zeros((d_model,)),
            ln3_g=jnp.ones((d_model,)), ln3_b=jnp.zeros((d_model,)),
            self_attn=self_attn_params(d_model), cross_attn=cross_attn_params(d_model),
            mlp=mlp_params(d_model, d_ff)))
    wout, bout = dense(d_model, out_dim)
    params["wout"], params["bout"] = wout, bout
    return params


# ------------------------------------------------------------------------------ run once

if __name__ == "__main__":
    # small config consistent with the module's constructor
    B = 2
    vocab_in, vocab_out = 16, 16
    d_model, out_dim = 32, 16
    n_heads, d_ff = 4, 4 * 32
    n_layers_enc, n_layers_dec = 2, 2
    in_block_size, out_block_size = 8, 8

    key = jax.random.PRNGKey(0)
    kp, kx, ky = jax.random.split(key, 3)
    params = init_params(kp, vocab_in=vocab_in, vocab_out=vocab_out, d_model=d_model,
                         out_dim=out_dim, n_enc=n_layers_enc, n_dec=n_layers_dec,
                         d_ff=d_ff, in_block_size=in_block_size,
                         out_block_size=out_block_size)

    x_tok = jax.random.randint(kx, (B, in_block_size), 0, vocab_in, dtype=jnp.int32)
    y_tok = jax.random.randint(ky, (B, out_block_size), 0, vocab_out, dtype=jnp.int32)

    logits, loss = seq2seq_transformer_forward(params, x_tok, y_tok, n_heads, targets=None)
    logits = jax.block_until_ready(logits)
    assert logits.shape == (B, 1, out_dim), logits.shape
    assert bool(jnp.all(jnp.isfinite(logits)))
    print("KERNEL_OK")
</pallas_src>

<mosaic_0001>
module attributes {stable_mosaic.version = 11 : i64} {
  func.func @_ln_qkv_kernel(%arg0: i32, %arg1: memref<16x32xbf16, #tpu.memory_space<vmem>>, %arg2: memref<1x32xf32, #tpu.memory_space<vmem>>, %arg3: memref<1x32xf32, #tpu.memory_space<vmem>>, %arg4: memref<32x32xbf16, #tpu.memory_space<vmem>>, %arg5: memref<1x32xf32, #tpu.memory_space<vmem>>, %arg6: memref<32x64xbf16, #tpu.memory_space<vmem>>, %arg7: memref<1x64xf32, #tpu.memory_space<vmem>>, %arg8: memref<16x32xbf16, #tpu.memory_space<vmem>>, %arg9: memref<16x64xbf16, #tpu.memory_space<vmem>>) attributes {dimension_semantics = [#tpu.dimension_semantics<parallel>], iteration_bounds = array<i64: 1>, scalar_prefetch = 0 : i64, scratch_operands = 0 : i64, tpu.core_type = #tpu.core_type<tc>, window_params = [{transform_indices = @transform_0, window_bounds = array<i64: 16, 32>}, {pipeline_mode = #tpu.pipeline_mode<synchronous>, transform_indices = @transform_1, window_bounds = array<i64: 1, 32>}, {pipeline_mode = #tpu.pipeline_mode<synchronous>, transform_indices = @transform_2, window_bounds = array<i64: 1, 32>}, {pipeline_mode = #tpu.pipeline_mode<synchronous>, transform_indices = @transform_3, window_bounds = array<i64: 32, 32>}, {pipeline_mode = #tpu.pipeline_mode<synchronous>, transform_indices = @transform_4, window_bounds = array<i64: 1, 32>}, {pipeline_mode = #tpu.pipeline_mode<synchronous>, transform_indices = @transform_5, window_bounds = array<i64: 32, 64>}, {pipeline_mode = #tpu.pipeline_mode<synchronous>, transform_indices = @transform_6, window_bounds = array<i64: 1, 64>}, {transform_indices = @transform_7, window_bounds = array<i64: 16, 32>}, {transform_indices = @transform_8, window_bounds = array<i64: 16, 64>}]} {
    %c0 = arith.constant 0 : index
    %c0_0 = arith.constant 0 : index
    %0 = vector.load %arg1[%c0, %c0_0] : memref<16x32xbf16, #tpu.memory_space<vmem>>, vector<16x32xbf16>
    %1 = arith.extf %0 : vector<16x32xbf16> to vector<16x32xf32>
    %cst = arith.constant dense<0.000000e+00> : vector<16xf32>
    %2 = vector.multi_reduction <add>, %1, %cst [1] : vector<16x32xf32> to vector<16xf32>
    %3 = vector.shape_cast %2 : vector<16xf32> to vector<16x1xf32>
    %cst_1 = arith.constant 3.200000e+01 : f32
    %4 = vector.broadcast %cst_1 : f32 to vector<16x1xf32>
    %5 = arith.divf %3, %4 : vector<16x1xf32>
    %6 = vector.broadcast %5 : vector<16x1xf32> to vector<16x32xf32>
    %7 = arith.subf %1, %6 : vector<16x32xf32>
    %8 = arith.mulf %7, %7 : vector<16x32xf32>
    %cst_2 = arith.constant dense<0.000000e+00> : vector<16xf32>
    %9 = vector.multi_reduction <add>, %8, %cst_2 [1] : vector<16x32xf32> to vector<16xf32>
    %10 = vector.shape_cast %9 : vector<16xf32> to vector<16x1xf32>
    %cst_3 = arith.constant 3.200000e+01 : f32
    %11 = vector.broadcast %cst_3 : f32 to vector<16x1xf32>
    %12 = arith.divf %10, %11 : vector<16x1xf32>
    %13 = vector.broadcast %5 : vector<16x1xf32> to vector<16x32xf32>
    %14 = arith.subf %1, %13 : vector<16x32xf32>
    %cst_4 = arith.constant 9.99999974E-6 : f32
    %15 = vector.broadcast %cst_4 : f32 to vector<16x1xf32>
    %16 = arith.addf %12, %15 : vector<16x1xf32>
    %17 = math.rsqrt %16 : vector<16x1xf32>
    %18 = vector.broadcast %17 : vector<16x1xf32> to vector<16x32xf32>
    %19 = arith.mulf %14, %18 : vector<16x32xf32>
    %c0_5 = arith.constant 0 : index
    %c0_6 = arith.constant 0 : index
    %20 = vector.load %arg2[%c0_5, %c0_6] : memref<1x32xf32, #tpu.memory_space<vmem>>, vector<1x32xf32>
    %21 = vector.broadcast %20 : vector<1x32xf32> to vector<16x32xf32>
    %22 = arith.mulf %19, %21 : vector<16x32xf32>
    %c0_7 = arith.constant 0 : index
    %c0_8 = arith.constant 0 : index
    %23 = vector.load %arg3[%c0_7, %c0_8] : memref<1x32xf32, #tpu.memory_space<vmem>>, vector<1x32xf32>
    %24 = vector.broadcast %23 : vector<1x32xf32> to vector<16x32xf32>
    %25 = arith.addf %22, %24 : vector<16x32xf32>
    %26 = arith.truncf %25 : vector<16x32xf32> to vector<16x32xbf16>
    %c0_9 = arith.constant 0 : index
    %c0_10 = arith.constant 0 : index
    %27 = vector.load %arg4[%c0_9, %c0_10] : memref<32x32xbf16, #tpu.memory_space<vmem>>, vector<32x32xbf16>
    %cst_11 = arith.constant dense<0.000000e+00> : vector<16x32xf32>
    %28 = tpu.matmul %26, %27, %cst_11 {dimension_numbers = #tpu.dot_dimension_numbers<[1], [0], [0], [1], [0, 0, 1, 1], [], []>} : vector<16x32xbf16>, vector<32x32xbf16>, vector<16x32xf32> -> vector<16x32xf32>
    %c0_12 = arith.constant 0 : index
    %c0_13 = arith.constant 0 : index
    %29 = vector.load %arg5[%c0_12, %c0_13] : memref<1x32xf32, #tpu.memory_space<vmem>>, vector<1x32xf32>
    %30 = vector.broadcast %29 : vector<1x32xf32> to vector<16x32xf32>
    %31 = arith.addf %28, %30 : vector<16x32xf32>
    %32 = arith.truncf %31 : vector<16x32xf32> to vector<16x32xbf16>
    %c0_14 = arith.constant 0 : index
    %c0_15 = arith.constant 0 : index
    %33 = vector.load %arg8[%c0_14, %c0_15] : memref<16x32xbf16, #tpu.memory_space<vmem>>, vector<16x32xbf16>
    tpu.vector_store %arg8[%c0_14, %c0_15], %32 {strides = array<i32>} : memref<16x32xbf16, #tpu.memory_space<vmem>>, vector<16x32xbf16>,
    %c0_16 = arith.constant 0 : index
    %c0_17 = arith.constant 0 : index
    %34 = vector.load %arg6[%c0_16, %c0_17] : memref<32x64xbf16, #tpu.memory_space<vmem>>, vector<32x64xbf16>
    %cst_18 = arith.constant dense<0.000000e+00> : vector<16x64xf32>
    %35 = tpu.matmul %26, %34, %cst_18 {dimension_numbers = #tpu.dot_dimension_numbers<[1], [0], [0], [1], [0, 0, 1, 1], [], []>} : vector<16x32xbf16>, vector<32x64xbf16>, vector<16x64xf32> -> vector<16x64xf32>
    %c0_19 = arith.constant 0 : index
    %c0_20 = arith.constant 0 : index
    %36 = vector.load %arg7[%c0_19, %c0_20] : memref<1x64xf32, #tpu.memory_space<vmem>>, vector<1x64xf32>
    %37 = vector.broadcast %36 : vector<1x64xf32> to vector<16x64xf32>
    %38 = arith.addf %35, %37 : vector<16x64xf32>
    %39 = arith.truncf %38 : vector<16x64xf32> to vector<16x64xbf16>
    %c0_21 = arith.constant 0 : index
    %c0_22 = arith.constant 0 : index
    %40 = vector.load %arg9[%c0_21, %c0_22] : memref<16x64xbf16, #tpu.memory_space<vmem>>, vector<16x64xbf16>
    tpu.vector_store %arg9[%c0_21, %c0_22], %39 {strides = array<i32>} : memref<16x64xbf16, #tpu.memory_space<vmem>>, vector<16x64xbf16>,
    return
  }
  func.func @transform_0(%arg0: i32) -> (i32, i32) {
    %c0_i32 = arith.constant 0 : i32
    %c0_i32_0 = arith.constant 0 : i32
    return %arg0, %c0_i32 : i32, i32
  }
  func.func @transform_1(%arg0: i32) -> (i32, i32) {
    %c0_i32 = arith.constant 0 : i32
    %c0_i32_0 = arith.constant 0 : i32
    %c0_i32_1 = arith.constant 0 : i32
    return %c0_i32, %c0_i32_0 : i32, i32
  }
  func.func @transform_2(%arg0: i32) -> (i32, i32) {
    %c0_i32 = arith.constant 0 : i32
    %c0_i32_0 = arith.constant 0 : i32
    %c0_i32_1 = arith.constant 0 : i32
    return %c0_i32, %c0_i32_0 : i32, i32
  }
  func.func @transform_3(%arg0: i32) -> (i32, i32) {
    %c0_i32 = arith.constant 0 : i32
    %c0_i32_0 = arith.constant 0 : i32
    %c0_i32_1 = arith.constant 0 : i32
    return %c0_i32, %c0_i32_0 : i32, i32
  }
  func.func @transform_4(%arg0: i32) -> (i32, i32) {
    %c0_i32 = arith.constant 0 : i32
    %c0_i32_0 = arith.constant 0 : i32
    %c0_i32_1 = arith.constant 0 : i32
    return %c0_i32, %c0_i32_0 : i32, i32
  }
  func.func @transform_5(%arg0: i32) -> (i32, i32) {
    %c0_i32 = arith.constant 0 : i32
    %c0_i32_0 = arith.constant 0 : i32
    %c0_i32_1 = arith.constant 0 : i32
    return %c0_i32, %c0_i32_0 : i32, i32
  }
  func.func @transform_6(%arg0: i32) -> (i32, i32) {
    %c0_i32 = arith.constant 0 : i32
    %c0_i32_0 = arith.constant 0 : i32
    %c0_i32_1 = arith.constant 0 : i32
    return %c0_i32, %c0_i32_0 : i32, i32
  }
  func.func @transform_7(%arg0: i32) -> (i32, i32) {
    %c0_i32 = arith.constant 0 : i32
    %c0_i32_0 = arith.constant 0 : i32
    return %arg0, %c0_i32 : i32, i32
  }
  func.func @transform_8(%arg0: i32) -> (i32, i32) {
    %c0_i32 = arith.constant 0 : i32
    %c0_i32_0 = arith.constant 0 : i32
    return %arg0, %c0_i32 : i32, i32
  }
}

</mosaic_0001>

<llo_original>
// kernel: tpu_custom_call.1
$region0: #{tpu_custom_call.1}
  #allocation0 [shape = 'u32[]', space=smem, size = 0x4, offset = 0x4, fixed_abs, tag = 'smem constant byte address 0x4 - core index']
  #allocation1 [shape = 'u32[72,128]{1,0:T(1,128)}', space=vmem, size = 0x9000, scoped, tag = 'internal scratch']
  %s0 = inlined_call_operand.hbm [shape: bf16[16,32], index: 0, kind: input, shape index: {}]
  %s1 = inlined_call_operand.hbm [shape: f32[1,32], index: 1, kind: input, shape index: {}]
  %s2 = inlined_call_operand.vmem [shape: f32[1,32], index: 2, kind: input, shape index: {}]
  %s3 = inlined_call_operand.hbm [shape: bf16[32,32], index: 3, kind: input, shape index: {}]
  %s4 = inlined_call_operand.vmem [shape: f32[1,32], index: 4, kind: input, shape index: {}]
  %s5 = inlined_call_operand.hbm [shape: bf16[32,64], index: 5, kind: input, shape index: {}]
  %s6 = inlined_call_operand.vmem [shape: f32[1,64], index: 6, kind: input, shape index: {}]
  %s7 = inlined_call_operand.hbm [shape: bf16[16,32], index: 7, kind: output, shape index: {0}]
  %s8 = inlined_call_operand.hbm [shape: bf16[16,64], index: 8, kind: output, shape index: {1}]
  %9 = xla_tuple %s7, %s8
  %s10 = sld [smem:[#allocation0]]
  $region62: #{tpu_custom_call.1} parent=0
    _
  %s12 = ssub.s32 1, %s10
  %s13 = scalar_select 0, %s12, %s10
  $region1: #{tpu_custom_call.1} parent=0
    #allocation2 [shape = 'u8[4096]{0}', space=vmem, size = 0x1000, scoped, tag = 'input window, operand 0, single buffered']
    #allocation3 [shape = 's32[1]{0}', space=sflag, size = 0x4, scoped, tag = 'scoped memory for tpu_custom_call.1']
    #allocation4 [shape = 's32[1]{0}', space=sflag, size = 0x4, scoped, tag = 'scoped memory for tpu_custom_call.1']
    #allocation5 [shape = 'u8[512]{0}', space=vmem, size = 0x400, scoped, tag = 'input window, operand 1, single buffered']
    #allocation6 [shape = 's32[1]{0}', space=sflag, size = 0x4, scoped, tag = 'scoped memory for tpu_custom_call.1']
    #allocation7 [shape = 'u8[8192]{0}', space=vmem, size = 0x2000, scoped, tag = 'input window, operand 3, single buffered']
    #allocation8 [shape = 'u8[8192]{0}', space=vmem, size = 0x2000, scoped, tag = 'input window, operand 5, single buffered']
    #allocation9 [shape = 's32[1]{0}', space=sflag, size = 0x4, scoped, tag = 'scoped memory for tpu_custom_call.1']
    #allocation10 [shape = 'u8[4096]{0}', space=vmem, size = 0x1000, scoped, tag = 'output window, operand 0, single buffered']
    #allocation11 [shape = 'u8[4096]{0}', space=vmem, size = 0x1000, scoped, tag = 'output window, operand 1, single buffered']
    #allocation12 [shape = 's32[1]{0}', space=sflag, size = 0x4, scoped, tag = 'scoped memory for tpu_custom_call.1']
    %14 = vsyncpa [#allocation3], 0
    %15 = vsyncpa [#allocation6], 0
    %16 = vsyncpa [#allocation9], 0
    %17 = vsyncpa [#allocation4], 0
    %18 = vsyncpa [#allocation12], 0
    // Predicated region
    $region2: #{tpu_custom_call.1} parent=1 // pred_check
      _
    $region3: #{tpu_custom_call.1} parent=1 // pred_check_branch
      %20 = sbr.rel (0) target = $region5
    $region4: #{tpu_custom_call.1} parent=1 // pred_region
      %22 = vsyncadd [#allocation3], 0
      %s23 = sshll.u32 %s0, 4
      %s24 = int_to_ptr.hbm [resolvable:$true] %s23
      %s25 = sshll.u32 [#allocation2], 4
      %s26 = int_to_ptr.vmem [resolvable:$true] %s25
      %31 = dma.hbm_to_vmem [thread:$0]  %s24, 128, %s26, [#allocation3], 64, 64, 4
    $region5: #{tpu_custom_call.1} parent=1 // pred_fallthru
      _
    // Predicated region
    $region6: #{tpu_custom_call.1} parent=1 // pred_check
      _
    $region7: #{tpu_custom_call.1} parent=1 // pred_check_branch
      %33 = sbr.rel (0) target = $region9
    $region8: #{tpu_custom_call.1} parent=1 // pred_region
      %35 = vsyncadd [#allocation6], 0
      %s37 = sshll.u32 %s1, 4
      %s38 = int_to_ptr.hbm [resolvable:$true] %s37
      %s39 = sshll.u32 [#allocation5], 4
      %s40 = int_to_ptr.vmem [resolvable:$true] %s39
      %42 = dma.hbm_to_vmem [thread:$0]  %s38, 16, %s40, [#allocation6]
    $region9: #{tpu_custom_call.1} parent=1 // pred_fallthru
      _
    // Predicated region
    $region10: #{tpu_custom_call.1} parent=1 // pred_check
      _
    $region11: #{tpu_custom_call.1} parent=1 // pred_check_branch
      %44 = sbr.rel (0) target = $region13
    $region12: #{tpu_custom_call.1} parent=1 // pred_region
      _
    $region13: #{tpu_custom_call.1} parent=1 // pred_fallthru
      _
    // Predicated region
    $region14: #{tpu_custom_call.1} parent=1 // pred_check
      _
    $region15: #{tpu_custom_call.1} parent=1 // pred_check_branch
      %46 = sbr.rel (0) target = $region17
    $region16: #{tpu_custom_call.1} parent=1 // pred_region
      %48 = vsyncadd [#allocation6], 0
      %s49 = sshll.u32 %s3, 4
      %s50 = int_to_ptr.hbm [resolvable:$true] %s49
      %s51 = sshll.u32 [#allocation7], 4
      %s52 = int_to_ptr.vmem [resolvable:$true] %s51
      %57 = dma.hbm_to_vmem [thread:$0]  %s50, 256, %s52, [#allocation6], 64, 64, 4
    $region17: #{tpu_custom_call.1} parent=1 // pred_fallthru
      _
    // Predicated region
    $region18: #{tpu_custom_call.1} parent=1 // pred_check
      _
    $region19: #{tpu_custom_call.1} parent=1 // pred_check_branch
      %59 = sbr.rel (0) target = $region21
    $region20: #{tpu_custom_call.1} parent=1 // pred_region
      _
    $region21: #{tpu_custom_call.1} parent=1 // pred_fallthru
      _
    // Predicated region
    $region22: #{tpu_custom_call.1} parent=1 // pred_check
      _
    $region23: #{tpu_custom_call.1} parent=1 // pred_check_branch
      %61 = sbr.rel (0) target = $region25
    $region24: #{tpu_custom_call.1} parent=1 // pred_region
      %63 = vsyncadd [#allocation9], 0
      %s64 = sshll.u32 %s5, 4
      %s65 = int_to_ptr.hbm [resolvable:$true] %s64
      %s66 = sshll.u32 [#allocation8], 4
      %s67 = int_to_ptr.vmem [resolvable:$true] %s66
      %72 = dma.hbm_to_vmem [thread:$0]  %s65, 256, %s67, [#allocation9], 64, 64, 4
    $region25: #{tpu_custom_call.1} parent=1 // pred_fallthru
      _
    // Predicated region
    $region26: #{tpu_custom_call.1} parent=1 // pred_check
      _
    $region27: #{tpu_custom_call.1} parent=1 // pred_check_branch
      %74 = sbr.rel (0) target = $region29
    $region28: #{tpu_custom_call.1} parent=1 // pred_region
      _
    $region29: #{tpu_custom_call.1} parent=1 // pred_fallthru
      _
    // Predicated region
    $region30: #{tpu_custom_call.1} parent=1 // pred_check
      _
    $region31: #{tpu_custom_call.1} parent=1 // pred_check_branch
      %76 = sbr.rel (0) target = $region33
    $region32: #{tpu_custom_call.1} parent=1 // pred_region
      %78 = dma.done [#allocation3], 128
    $region33: #{tpu_custom_call.1} parent=1 // pred_fallthru
      _
    // Predicated region
    $region34: #{tpu_custom_call.1} parent=1 // pred_check
      _
    $region35: #{tpu_custom_call.1} parent=1 // pred_check_branch
      %80 = sbr.rel (0) target = $region37
    $region36: #{tpu_custom_call.1} parent=1 // pred_region
      %82 = dma.done [#allocation6], 16
    $region37: #{tpu_custom_call.1} parent=1 // pred_fallthru
      _
    // Predicated region
    $region38: #{tpu_custom_call.1} parent=1 // pred_check
      _
    $region39: #{tpu_custom_call.1} parent=1 // pred_check_branch
      %84 = sbr.rel (0) target = $region41
    $region40: #{tpu_custom_call.1} parent=1 // pred_region
      %86 = dma.done [#allocation6], 256
    $region41: #{tpu_custom_call.1} parent=1 // pred_fallthru
      _
    // Predicated region
    $region42: #{tpu_custom_call.1} parent=1 // pred_check
      _
    $region43: #{tpu_custom_call.1} parent=1 // pred_check_branch
      %88 = sbr.rel (0) target = $region45
    $region44: #{tpu_custom_call.1} parent=1 // pred_region
      %90 = dma.done [#allocation9], 256
    $region45: #{tpu_custom_call.1} parent=1 // pred_fallthru
      _
    %v92 = vld [vmem:[#allocation2] sm:$0xf]
    %v93 = vld [vmem:[#allocation2 + $0x4] sm:$0xf]
    %v94 = vunpack.c.l.bf16 %v92
    %v95 = vunpack.c.l.bf16 %v93
    %vm96 = vcmask 261120
    %v97 = vsel %vm96, %v94, 0.0
    %98 = vadd.xlane.f32.xlu0 %v97
    %v99 = vpop.xlane.xlu0 %98
    %v100 = vsel %vm96, %v95, 0.0
    %101 = vadd.xlane.f32.xlu0 %v100
    %v102 = vpop.xlane.xlu0 %101
    %v103 = vrcp.pop 32.0
    %v104 = vmul.f32 32.0, %v103
    %v105 = vsub.f32 1.0, %v104
    %v106 = vmul.f32 %v103, %v105
    %v107 = vadd.f32 %v103, %v106
    %vm108 = vweird.f32 %v103
    %v109 = vsel %vm108, %v103, %v107
    %v110 = vmul.f32 %v99, %v109
    %v111 = vmul.f32 %v102, %v109
    %v112 = vsub.f32 %v94, %v110
    %v113 = vsub.f32 %v95, %v111
    %v114 = vmul.f32 %v112, %v112
    %v115 = vmul.f32 %v113, %v113
    %v116 = vsel %vm96, %v114, 0.0
    %117 = vadd.xlane.f32.xlu0 %v116
    %v118 = vpop.xlane.xlu0 %117
    %v119 = vsel %vm96, %v115, 0.0
    %120 = vadd.xlane.f32.xlu0 %v119
    %v121 = vpop.xlane.xlu0 %120
    %v122 = vmul.f32 %v118, %v109
    %v123 = vmul.f32 %v121, %v109
    %v124 = vadd.f32 %v122, 1e-05
    %v125 = vadd.f32 %v123, 1e-05
    %v126 = vrsqrt.pop %v124
    %v127 = vmul.f32 %v126, %v124
    %v128 = vmul.f32 %v127, %v126
    %v129 = vmul.f32 0.5, %v128
    %v130 = vsub.f32 1.5, %v129
    %v131 = vmul.f32 %v126, %v130
    %vm132 = vweird.f32 %v124
    %vm133 = vweird.f32 %v126
    %vm134 = vmor %vm132, %vm133
    %v135 = vsel %vm134, %v126, %v131
    %v136 = vrsqrt.pop %v125
    %v137 = vmul.f32 %v136, %v125
    %v138 = vmul.f32 %v137, %v136
    %v139 = vmul.f32 0.5, %v138
    %v140 = vsub.f32 1.5, %v139
    %v141 = vmul.f32 %v136, %v140
    %vm142 = vweird.f32 %v125
    %vm143 = vweird.f32 %v136
    %vm144 = vmor %vm142, %vm143
    %v145 = vsel %vm144, %v136, %v141
    %v146 = vmul.f32 %v112, %v135
    %v147 = vmul.f32 %v113, %v145
    %v148 = vld [vmem:[#allocation5] sm:$0x1]
    %v150 = vperm.slane %v148, 0
    %v152 = vmul.f32 %v146, %v150
    %v153 = vmul.f32 %v147, %v150
    %v154 = vld [vmem:[%s2] sm:$0x1]
    %v156 = vperm.slane %v154, 0
    %v158 = vadd.f32 %v152, %v156
    %v159 = vadd.f32 %v153, %v156
    %v160 = vpack.c.bf16 %v159, %v158
    %v161 = vld [vmem:[#allocation7] sm:$0xf]
    %v162 = vld [vmem:[#allocation7 + $0x4] sm:$0xf]
    %v163 = vld [vmem:[#allocation7 + $0x8] sm:$0xf]
    %v164 = vld [vmem:[#allocation7 + $0xc] sm:$0xf]
    %v165 = vld [vmem:[%s4] sm:$0x1]
    %v167 = vperm.slane %v165, 0
    %v173 = vunpack.c.l.b16 %v161
    %v174 = vunpack.c.l.b16 %v162
    %v175 = vunpack.c.l.b16 %v163
    %v176 = vunpack.c.l.b16 %v164
    %v177 = vpack.c.b16 %v174, %v173
    %v178 = vpack.c.b16 %v176, %v175
    %v182 = vsel %vm96, %v160, 0
    %184 = vmatpush.bf16.msra.mxu0 0
    %185 = vmatpush.bf16.msra.mxu0 0
    %186 = vmatpush.bf16.msra.mxu0 0
    %187 = vmatpush.bf16.msra.mxu0 0
    %188 = vmatpush.bf16.msra.mxu0 0
    %189 = vmatpush.bf16.msra.mxu0 0
    %190 = vmatpush.bf16.msra.mxu0 %v178
    %191 = vmatpush.bf16.msra.mxu0 %v177
    %192 = vmatmul.bf16.gmra.mxu0 %v182
    %v193 = vpop.f32.mrf.mxu0
    %v194 = vadd.f32 %v167, %v193
    %v195 = vpop.f32.mrf.mxu0
    %v196 = vadd.f32 %v167, %v195
    %197 = vdwg.mxu0
    %v198 = vpack.c.bf16 %v194, %v194
    %v199 = vpack.c.bf16 %v196, %v196
    %vm200 = vcmask 257024
    %201 = vst.msk [vmem:[#allocation10] sm:$0xf] %vm200, %v198
    %202 = vst.msk [vmem:[#allocation10 + $0x4] sm:$0xf] %vm200, %v199
    %v203 = vld [vmem:[#allocation8] sm:$0xf]
    %v204 = vld [vmem:[#allocation8 + $0x4] sm:$0xf]
    %v205 = vld [vmem:[#allocation8 + $0x8] sm:$0xf]
    %v206 = vld [vmem:[#allocation8 + $0xc] sm:$0xf]
    %v207 = vld [vmem:[%s6] sm:$0x1]
    %v209 = vperm.slane %v207, 0
    %v215 = vunpack.c.l.b16 %v203
    %v216 = vunpack.c.l.b16 %v204
    %v217 = vunpack.c.l.b16 %v205
    %v218 = vunpack.c.l.b16 %v206
    %v219 = vpack.c.b16 %v216, %v215
    %v220 = vpack.c.b16 %v218, %v217
    %223 = vmatpush.bf16.msra.mxu0 0
    %224 = vmatpush.bf16.msra.mxu0 0
    %225 = vmatpush.bf16.msra.mxu0 0
    %226 = vmatpush.bf16.msra.mxu0 0
    %227 = vmatpush.bf16.msra.mxu0 0
    %228 = vmatpush.bf16.msra.mxu0 0
    %229 = vmatpush.bf16.msra.mxu0 %v220
    %230 = vmatpush.bf16.msra.mxu0 %v219
    %231 = vmatmul.bf16.gmra.mxu0 %v182
    %v232 = vpop.f32.mrf.mxu0
    %v233 = vadd.f32 %v209, %v232
    %v234 = vpop.f32.mrf.mxu0
    %v235 = vadd.f32 %v209, %v234
    %236 = vdwg.mxu0
    %v237 = vpack.c.bf16 %v233, %v233
    %v238 = vpack.c.bf16 %v235, %v235
    %vm239 = vcmask 519168
    %240 = vst.msk [vmem:[#allocation11] sm:$0xf] %vm239, %v237
    %241 = vst.msk [vmem:[#allocation11 + $0x4] sm:$0xf] %vm239, %v238
    // Predicated region
    $region46: #{tpu_custom_call.1} parent=1 // pred_check
      _
    $region47: #{tpu_custom_call.1} parent=1 // pred_check_branch
      %243 = sbr.rel (0) target = $region49
    $region48: #{tpu_custom_call.1} parent=1 // pred_region
      %245 = vsyncadd [#allocation4], 0
      %s246 = sshll.u32 [#allocation10], 4
      %s247 = int_to_ptr.vmem [resolvable:$true] %s246
      %s248 = sshll.u32 %s7, 4
      %s249 = int_to_ptr.hbm [resolvable:$true] %s248
      %254 = dma.vmem_to_hbm [thread:$0]  %s247, 128, %s249, [#allocation4], 64, 64, 4
    $region49: #{tpu_custom_call.1} parent=1 // pred_fallthru
      _
    // Predicated region
    $region50: #{tpu_custom_call.1} parent=1 // pred_check
      _
    $region51: #{tpu_custom_call.1} parent=1 // pred_check_branch
      %256 = sbr.rel (0) target = $region53
    $region52: #{tpu_custom_call.1} parent=1 // pred_region
      %258 = vsyncadd [#allocation12], 0
      %s259 = sshll.u32 [#allocation11], 4
      %s260 = int_to_ptr.vmem [resolvable:$true] %s259
      %s261 = sshll.u32 %s8, 4
      %s262 = int_to_ptr.hbm [resolvable:$true] %s261
      %267 = dma.vmem_to_hbm [thread:$0]  %s260, 128, %s262, [#allocation12], 64, 64, 4
    $region53: #{tpu_custom_call.1} parent=1 // pred_fallthru
      _
    // Predicated region
    $region54: #{tpu_custom_call.1} parent=1 // pred_check
      _
    $region55: #{tpu_custom_call.1} parent=1 // pred_check_branch
      %269 = sbr.rel (0) target = $region57
    $region56: #{tpu_custom_call.1} parent=1 // pred_region
      %271 = dma.done [#allocation4], 128
    $region57: #{tpu_custom_call.1} parent=1 // pred_fallthru
      _
    // Predicated region
    $region58: #{tpu_custom_call.1} parent=1 // pred_check
      _
    $region59: #{tpu_custom_call.1} parent=1 // pred_check_branch
      %273 = sbr.rel (0) target = $region61
    $region60: #{tpu_custom_call.1} parent=1 // pred_region
      %275 = dma.done [#allocation12], 128
    $region61: #{tpu_custom_call.1} parent=1 // pred_fallthru
      _
    %276 = vsyncpa [#allocation3], 1
    %277 = vsyncpa [#allocation6], 1
    %278 = vsyncpa [#allocation9], 1
    %279 = vsyncpa [#allocation4], 1
    %280 = vsyncpa [#allocation12], 1

</llo_original>
